<compile_context>
chip_gen: v7x
topology: tpu7x:2x2x1
jax: 0.10.0
libtpu: 0.0.40
codegen_flags: <defaults>
</compile_context>

<pallas_src>
import functools

import jax
import jax.numpy as jnp
from jax.experimental import pallas as pl
from jax.experimental.pallas import tpu as pltpu


def _voxel_terms(dot, nx2, nt2, eps):
    """Per-voxel angular / scale terms from channel sums (f32, any 2-D shape)."""
    norm_x = jnp.sqrt(nx2)
    norm_t = jnp.sqrt(nt2)
    denom = jnp.maximum(norm_x * norm_t, eps)
    # EUP approximate reciprocal (frees the VALU divide sequence) + one Newton
    # refinement step to stay ~f32 accurate.
    r = pl.reciprocal(denom, approx=True)
    r = r * (2.0 - denom * r)
    cos = dot * r
    ang = 1.0 - cos
    d = norm_x - norm_t
    return ang, d * d


def _pack_partials(ang_sum, sc_sum, cnt_sum):
    """Pack three scalar partial sums into one dense (8, 128) f32 output block."""
    row = jax.lax.broadcasted_iota(jnp.int32, (8, 128), 0)
    return jnp.where(row == 0, ang_sum,
           jnp.where(row == 1, sc_sum,
           jnp.where(row == 2, cnt_sum, jnp.float32(0.0))))


def _aas_kernel(*refs, weighted, four_d, tail_idx, tail_valid, eps):
    """One grid step: reduce a (C, TR, 128) tile (4-D path) or a (C, TB) tile
    (3-D path for spatial % 128 != 0) to three scalars."""
    if weighted:
        x_ref, t_ref, w_ref, o_ref = refs
    else:
        x_ref, t_ref, o_ref = refs
        w_ref = None

    x = x_ref[0].astype(jnp.float32)
    t = t_ref[0].astype(jnp.float32)
    kd = not four_d  # keep dims on the (C, TB) layout so everything stays 2-D
    dot = jnp.sum(x * t, axis=0, keepdims=kd)
    nx2 = jnp.sum(x * x, axis=0, keepdims=kd)
    nt2 = jnp.sum(t * t, axis=0, keepdims=kd)
    ang, sc = _voxel_terms(dot, nx2, nt2, eps)

    if weighted:
        w = (w_ref[0, 0] if four_d else w_ref[0]).astype(jnp.float32)
        ang = w * ang
        sc = w * sc
        pos = (w > 0.0).astype(jnp.float32)
    else:
        pos = None

    def partial_sums(mask):
        if mask is None:
            a, s = jnp.sum(ang), jnp.sum(sc)
            c = jnp.sum(pos) if weighted else jnp.float32(0.0)
        else:
            a = jnp.sum(jnp.where(mask, ang, 0.0))
            s = jnp.sum(jnp.where(mask, sc, 0.0))
            c = (jnp.sum(jnp.where(mask, pos, 0.0)) if weighted
                 else jnp.float32(0.0))
        return a, s, c

    if tail_idx is None:
        # Grid tiles the reduction axis exactly: no masking anywhere.
        o_ref[0] = _pack_partials(*partial_sums(None))
    else:
        r_blk = pl.program_id(1)

        @pl.when(r_blk != tail_idx)
        def _():
            o_ref[0] = _pack_partials(*partial_sums(None))

        @pl.when(r_blk == tail_idx)
        def _():
            # Only the final block is ragged: mask rows (4-D path) or lanes
            # (3-D path) past the true extent (they read Pallas block padding
            # / uninitialized VMEM). Small compare, never an int32 flat index.
            axis = 0 if four_d else 1
            idx = jax.lax.broadcasted_iota(jnp.int32, ang.shape, axis)
            o_ref[0] = _pack_partials(*partial_sums(idx < tail_valid))


def _vmem_budget_bytes():
    """Generation-aware scoped-VMEM budget (3/4 of capacity, capped at 96 MiB)."""
    try:
        info = pltpu.get_tpu_info()
        cap = int(getattr(info, "vmem_capacity_bytes", 0)) or (64 << 20)
    except Exception:
        cap = 64 << 20           # conservative fallback (v7x per-TC VMEM)
    return int(min(cap * 3 // 4, 96 << 20))


def angular_and_scale_loss(x, t, weight=None, *, alpha, eps=1e-6):
    """Pallas TPU forward of AngularAndScaleLoss.

    x, t: (N, C, *spatial).  weight (optional): per-voxel weight with
    N * prod(spatial) elements, e.g. shape (N, 1, *spatial) or (N, *spatial).
    Returns (alpha*a + (1-alpha)*s, alpha*a, (1-alpha)*s) as f32 scalars.
    NOTE: like the PyTorch module, a weighted call with no weight > 0 yields
    Inf/NaN (division by a zero norm_term).
    """
    if x.shape != t.shape or x.ndim < 3:
        raise ValueError(f"input/target must share shape (N,C,*spatial): "
                         f"{x.shape} vs {t.shape}")
    N, C = int(x.shape[0]), int(x.shape[1])
    S = 1
    for d in x.shape[2:]:
        S *= int(d)

    weighted = weight is not None
    if weighted and weight.size != N * S:
        # TODO(synk): the original module's raw PyTorch broadcasting for other
        # weight shapes is ill-defined for batch > 1; only per-voxel weights
        # (N * prod(spatial) elements) are supported here.
        raise ValueError(f"weight must have N*prod(spatial)={N * S} elements, "
                         f"got {weight.size}")

    itemsize = jnp.dtype(x.dtype).itemsize
    w_item = jnp.dtype(weight.dtype).itemsize if weighted else 0

    four_d = (S % 128 == 0)
    RL = pl.cdiv(S, 128)                       # spatial extent in rows of 128

    # --- generation-aware tile sizing --------------------------------------
    vmem_limit = _vmem_budget_bytes()
    per_row_bytes = 128 * (2 * C * itemsize + w_item)   # x + t (+ w) per 128 voxels
    dma_budget = vmem_limit - (4 << 20)                 # outputs / headroom
    tr = max(8, (dma_budget // (2 * per_row_bytes)) // 8 * 8)  # double-buffered
    if tr >= RL:
        tr = RL                                 # single block along R
    # Keep >= 2 grid blocks per chip so both v7x TensorCores get work.
    if N * pl.cdiv(RL, tr) < 2:
        half = (((RL + 1) // 2) + 7) // 8 * 8
        if half < RL:
            tr = half
    NR = pl.cdiv(RL, tr)
    # Never ask for less VMEM than the double-buffered footprint actually needs.
    vmem_limit = int(max(vmem_limit, 2 * per_row_bytes * tr + (6 << 20)))

    # --- build views (no padded copies) and block specs ---------------------
    if four_d:
        R = RL
        x_v = x.reshape(N, C, R, 128)           # free reshape
        t_v = t.reshape(N, C, R, 128)
        in_specs = [pl.BlockSpec((1, C, tr, 128), lambda n, r: (n, 0, r, 0)),
                    pl.BlockSpec((1, C, tr, 128), lambda n, r: (n, 0, r, 0))]
        args = [x_v, t_v]
        if weighted:
            w_v = weight.reshape(N, 1, R, 128)
            in_specs.append(pl.BlockSpec((1, 1, tr, 128),
                                         lambda n, r: (n, 0, r, 0)))
            args.append(w_v)
        tail_ragged = (R % tr) != 0
        tail_valid = R - (NR - 1) * tr           # valid rows in last block
    else:
        # spatial % 128 != 0: stream the flat (N, C, S) view directly; the
        # ragged final block is masked in-kernel -> no padded copy of x/t/w.
        tb = tr * 128
        x_v = x.reshape(N, C, S)
        t_v = t.reshape(N, C, S)
        in_specs = [pl.BlockSpec((1, C, tb), lambda n, r: (n, 0, r)),
                    pl.BlockSpec((1, C, tb), lambda n, r: (n, 0, r))]
        args = [x_v, t_v]
        if weighted:
            w_v = weight.reshape(N, 1, S)
            in_specs.append(pl.BlockSpec((1, 1, tb), lambda n, r: (n, 0, r)))
            args.append(w_v)
        tail_ragged = True                       # S % tb != 0 by construction
        tail_valid = S - (NR - 1) * tb           # valid lanes in last block

    kernel = functools.partial(
        _aas_kernel, weighted=weighted, four_d=four_d,
        tail_idx=(NR - 1) if tail_ragged else None,
        tail_valid=int(tail_valid), eps=float(eps))

    out_shape = jax.ShapeDtypeStruct((N * NR, 8, 128), jnp.float32)
    out_spec = pl.BlockSpec((1, 8, 128), lambda n, r: (n * NR + r, 0, 0))

    bytes_accessed = (2 * N * C * S * itemsize
                      + (N * S * w_item if weighted else 0)
                      + N * NR * 8 * 128 * 4)
    cost = pl.CostEstimate(
        flops=int(N * S * (6 * C + 18)),
        transcendentals=int(3 * N * S),
        bytes_accessed=int(bytes_accessed),
    )

    partials = pl.pallas_call(
        kernel,
        out_shape=out_shape,
        grid=(N, NR),
        in_specs=in_specs,
        out_specs=out_spec,
        compiler_params=pltpu.CompilerParams(
            dimension_semantics=("parallel", "parallel"),
            vmem_limit_bytes=int(vmem_limit)),
        cost_estimate=cost,
    )(*args)

    # Tiny tree-sum of per-tile partials in plain JAX.
    ang_total = jnp.sum(partials[:, 0, 0])
    sc_total = jnp.sum(partials[:, 1, 0])
    if weighted:
        norm_term = jnp.sum(partials[:, 2, 0])
    else:
        norm_term = jnp.float32(N * S)

    a_loss = alpha * (ang_total / norm_term)
    s_loss = (1.0 - alpha) * (sc_total / norm_term)
    return a_loss + s_loss, a_loss, s_loss


def _reference(x, t, weight, alpha, eps=1e-6):
    """Pure-JAX reference with the same semantics (for correctness check)."""
    xf = x.astype(jnp.float32)
    tf = t.astype(jnp.float32)
    norm_x = jnp.sqrt(jnp.sum(xf * xf, axis=1))       # (N, *spatial)
    norm_t = jnp.sqrt(jnp.sum(tf * tf, axis=1))
    dot = jnp.sum(xf * tf, axis=1)
    cos = dot / jnp.maximum(norm_x * norm_t, eps)
    ang = 1.0 - cos
    sc = (norm_x - norm_t) ** 2
    if weight is not None:
        w = weight.reshape(ang.shape).astype(jnp.float32)
        norm_term = jnp.sum((w > 0).astype(jnp.float32))
        a = jnp.sum(w * ang) / norm_term
        s = jnp.sum(w * sc) / norm_term
    else:
        norm_term = float(ang.size)
        a = jnp.sum(ang) / norm_term
        s = jnp.sum(sc) / norm_term
    return alpha * a + (1.0 - alpha) * s, alpha * a, (1.0 - alpha) * s


if __name__ == "__main__":
    key = jax.random.PRNGKey(0)
    k1, k2, k3 = jax.random.split(key, 3)
    alpha = 0.25
    N, C = 2, 3

    # Aligned spatial (prod(spatial) % 128 == 0): dense 4-D path.
    H, W = 16, 16
    x = jax.random.normal(k1, (N, C, H, W), dtype=jnp.float32)
    t = jax.random.normal(k2, (N, C, H, W), dtype=jnp.float32)
    w = jax.random.uniform(k3, (N, 1, H, W), dtype=jnp.float32)

    # Unaligned spatial (prod(spatial) % 128 != 0): pad-free 3-D path.
    Hu, Wu = 10, 10
    xu = jax.random.normal(k1, (N, C, Hu, Wu), dtype=jnp.float32)
    tu = jax.random.normal(k2, (N, C, Hu, Wu), dtype=jnp.float32)
    wu = jax.random.uniform(k3, (N, 1, Hu, Wu), dtype=jnp.float32)

    cases = [(x, t, w), (x, t, None), (xu, tu, wu), (xu, tu, None)]
    for xi, ti, wi in cases:
        got = jax.block_until_ready(
            angular_and_scale_loss(xi, ti, wi, alpha=alpha))
        ref = _reference(xi, ti, wi, alpha)
        for g, r in zip(got, ref):
            assert jnp.allclose(g, r, rtol=1e-4, atol=2e-6), \
                (g, r, xi.shape, wi is None)

    print("KERNEL_OK")
</pallas_src>

<mosaic_0001>
module attributes {stable_mosaic.version = 11 : i64} {
  func.func @_aas_kernel(%arg0: i32, %arg1: i32, %arg2: memref<1x3x2x128xf32, #tpu.memory_space<vmem>>, %arg3: memref<1x3x2x128xf32, #tpu.memory_space<vmem>>, %arg4: memref<1x1x2x128xf32, #tpu.memory_space<vmem>>, %arg5: memref<1x8x128xf32, #tpu.memory_space<vmem>>) attributes {dimension_semantics = [#tpu.dimension_semantics<parallel>, #tpu.dimension_semantics<parallel>], iteration_bounds = array<i64: 2, 1>, scalar_prefetch = 0 : i64, scratch_operands = 0 : i64, tpu.core_type = #tpu.core_type<tc>, window_params = [{transform_indices = @transform_0, window_bounds = array<i64: 1, 3, 2, 128>}, {transform_indices = @transform_1, window_bounds = array<i64: 1, 3, 2, 128>}, {transform_indices = @transform_2, window_bounds = array<i64: 1, 1, 2, 128>}, {transform_indices = @transform_3, window_bounds = array<i64: 1, 8, 128>}]} {
    %c0 = arith.constant 0 : index
    %c0_0 = arith.constant 0 : index
    %c0_1 = arith.constant 0 : index
    %c0_2 = arith.constant 0 : index
    %0 = vector.load %arg2[%c0, %c0_0, %c0_1, %c0_2] : memref<1x3x2x128xf32, #tpu.memory_space<vmem>>, vector<1x3x2x128xf32>
    %1 = vector.shape_cast %0 : vector<1x3x2x128xf32> to vector<3x2x128xf32>
    %c0_3 = arith.constant 0 : index
    %c0_4 = arith.constant 0 : index
    %c0_5 = arith.constant 0 : index
    %c0_6 = arith.constant 0 : index
    %2 = vector.load %arg3[%c0_3, %c0_4, %c0_5, %c0_6] : memref<1x3x2x128xf32, #tpu.memory_space<vmem>>, vector<1x3x2x128xf32>
    %3 = vector.shape_cast %2 : vector<1x3x2x128xf32> to vector<3x2x128xf32>
    %4 = arith.mulf %1, %3 : vector<3x2x128xf32>
    %cst = arith.constant dense<0.000000e+00> : vector<2x128xf32>
    %5 = vector.multi_reduction <add>, %4, %cst [0] : vector<3x2x128xf32> to vector<2x128xf32>
    %6 = arith.mulf %1, %1 : vector<3x2x128xf32>
    %cst_7 = arith.constant dense<0.000000e+00> : vector<2x128xf32>
    %7 = vector.multi_reduction <add>, %6, %cst_7 [0] : vector<3x2x128xf32> to vector<2x128xf32>
    %8 = arith.mulf %3, %3 : vector<3x2x128xf32>
    %cst_8 = arith.constant dense<0.000000e+00> : vector<2x128xf32>
    %9 = vector.multi_reduction <add>, %8, %cst_8 [0] : vector<3x2x128xf32> to vector<2x128xf32>
    %10 = math.sqrt %7 : vector<2x128xf32>
    %11 = math.sqrt %9 : vector<2x128xf32>
    %12 = arith.mulf %10, %11 : vector<2x128xf32>
    %cst_9 = arith.constant 9.99999997E-7 : f32
    %13 = vector.broadcast %cst_9 : f32 to vector<2x128xf32>
    %14 = arith.maximumf %12, %13 : vector<2x128xf32>
    %15 = tpu.reciprocal %14 {approx = true} : vector<2x128xf32> -> vector<2x128xf32>
    %16 = arith.mulf %14, %15 : vector<2x128xf32>
    %cst_10 = arith.constant 2.000000e+00 : f32
    %17 = vector.broadcast %cst_10 : f32 to vector<2x128xf32>
    %18 = arith.subf %17, %16 : vector<2x128xf32>
    %19 = arith.mulf %15, %18 : vector<2x128xf32>
    %20 = arith.mulf %5, %19 : vector<2x128xf32>
    %cst_11 = arith.constant 1.000000e+00 : f32
    %21 = vector.broadcast %cst_11 : f32 to vector<2x128xf32>
    %22 = arith.subf %21, %20 : vector<2x128xf32>
    %23 = arith.subf %10, %11 : vector<2x128xf32>
    %24 = arith.mulf %23, %23 : vector<2x128xf32>
    %c0_12 = arith.constant 0 : index
    %c0_13 = arith.constant 0 : index
    %c0_14 = arith.constant 0 : index
    %c0_15 = arith.constant 0 : index
    %25 = vector.load %arg4[%c0_12, %c0_13, %c0_14, %c0_15] : memref<1x1x2x128xf32, #tpu.memory_space<vmem>>, vector<1x1x2x128xf32>
    %26 = vector.shape_cast %25 : vector<1x1x2x128xf32> to vector<2x128xf32>
    %27 = arith.mulf %26, %22 : vector<2x128xf32>
    %28 = arith.mulf %26, %24 : vector<2x128xf32>
    %cst_16 = arith.constant 0.000000e+00 : f32
    %29 = vector.broadcast %cst_16 : f32 to vector<2x128xf32>
    %30 = arith.cmpf ogt, %26, %29 : vector<2x128xf32>
    %31 = arith.extui %30 : vector<2x128xi1> to vector<2x128xi32>
    %32 = arith.sitofp %31 : vector<2x128xi32> to vector<2x128xf32>
    %33 = vector.shape_cast %27 : vector<2x128xf32> to vector<1x2x128xf32>
    %cst_17 = arith.constant dense<0.000000e+00> : vector<1xf32>
    %34 = vector.multi_reduction <add>, %33, %cst_17 [1, 2] : vector<1x2x128xf32> to vector<1xf32>
    %35 = vector.shape_cast %34 : vector<1xf32> to vector<1x1x1xf32>
    %36 = vector.extract %35[0, 0, 0] : f32 from vector<1x1x1xf32>
    %37 = vector.shape_cast %28 : vector<2x128xf32> to vector<1x2x128xf32>
    %cst_18 = arith.constant dense<0.000000e+00> : vector<1xf32>
    %38 = vector.multi_reduction <add>, %37, %cst_18 [1, 2] : vector<1x2x128xf32> to vector<1xf32>
    %39 = vector.shape_cast %38 : vector<1xf32> to vector<1x1x1xf32>
    %40 = vector.extract %39[0, 0, 0] : f32 from vector<1x1x1xf32>
    %41 = vector.shape_cast %32 : vector<2x128xf32> to vector<1x2x128xf32>
    %cst_19 = arith.constant dense<0.000000e+00> : vector<1xf32>
    %42 = vector.multi_reduction <add>, %41, %cst_19 [1, 2] : vector<1x2x128xf32> to vector<1xf32>
    %43 = vector.shape_cast %42 : vector<1xf32> to vector<1x1x1xf32>
    %44 = vector.extract %43[0, 0, 0] : f32 from vector<1x1x1xf32>
    %45 = tpu.iota {dimensions = array<i32: 0>} : vector<8x128xi32>
    %c0_i32 = arith.constant 0 : i32
    %46 = vector.broadcast %c0_i32 : i32 to vector<8x128xi32>
    %47 = arith.cmpi eq, %45, %46 : vector<8x128xi32>
    %c1_i32 = arith.constant 1 : i32
    %48 = vector.broadcast %c1_i32 : i32 to vector<8x128xi32>
    %49 = arith.cmpi eq, %45, %48 : vector<8x128xi32>
    %c2_i32 = arith.constant 2 : i32
    %50 = vector.broadcast %c2_i32 : i32 to vector<8x128xi32>
    %51 = arith.cmpi eq, %45, %50 : vector<8x128xi32>
    %cst_20 = arith.constant 0.000000e+00 : f32
    %52 = vector.broadcast %44 : f32 to vector<8x128xf32>
    %53 = vector.broadcast %cst_20 : f32 to vector<8x128xf32>
    %54 = arith.select %51, %52, %53 : vector<8x128xi1>, vector<8x128xf32>
    %55 = vector.broadcast %40 : f32 to vector<8x128xf32>
    %56 = arith.select %49, %55, %54 : vector<8x128xi1>, vector<8x128xf32>
    %57 = vector.broadcast %36 : f32 to vector<8x128xf32>
    %58 = arith.select %47, %57, %56 : vector<8x128xi1>, vector<8x128xf32>
    %c0_21 = arith.constant 0 : index
    %c0_22 = arith.constant 0 : index
    %c0_23 = arith.constant 0 : index
    %59 = vector.load %arg5[%c0_21, %c0_22, %c0_23] : memref<1x8x128xf32, #tpu.memory_space<vmem>>, vector<1x8x128xf32>
    %60 = vector.shape_cast %59 : vector<1x8x128xf32> to vector<8x128xf32>
    %61 = vector.shape_cast %58 : vector<8x128xf32> to vector<1x8x128xf32>
    tpu.vector_store %arg5[%c0_21, %c0_22, %c0_23], %61 {strides = array<i32>} : memref<1x8x128xf32, #tpu.memory_space<vmem>>, vector<1x8x128xf32>,
    return
  }
  func.func @transform_0(%arg0: i32, %arg1: i32) -> (i32, i32, i32, i32) {
    %c0_i32 = arith.constant 0 : i32
    %c0_i32_0 = arith.constant 0 : i32
    %c0_i32_1 = arith.constant 0 : i32
    return %arg0, %c0_i32, %arg1, %c0_i32_0 : i32, i32, i32, i32
  }
  func.func @transform_1(%arg0: i32, %arg1: i32) -> (i32, i32, i32, i32) {
    %c0_i32 = arith.constant 0 : i32
    %c0_i32_0 = arith.constant 0 : i32
    %c0_i32_1 = arith.constant 0 : i32
    return %arg0, %c0_i32, %arg1, %c0_i32_0 : i32, i32, i32, i32
  }
  func.func @transform_2(%arg0: i32, %arg1: i32) -> (i32, i32, i32, i32) {
    %c0_i32 = arith.constant 0 : i32
    %c0_i32_0 = arith.constant 0 : i32
    %c0_i32_1 = arith.constant 0 : i32
    return %arg0, %c0_i32, %arg1, %c0_i32_0 : i32, i32, i32, i32
  }
  func.func @transform_3(%arg0: i32, %arg1: i32) -> (i32, i32, i32) {
    %c1_i32 = arith.constant 1 : i32
    %0 = arith.muli %arg0, %c1_i32 : i32
    %1 = arith.addi %0, %arg1 : i32
    %c0_i32 = arith.constant 0 : i32
    %c0_i32_0 = arith.constant 0 : i32
    %c0_i32_1 = arith.constant 0 : i32
    return %1, %c0_i32, %c0_i32_0 : i32, i32, i32
  }
}

</mosaic_0001>

<llo_original>
// kernel: tpu_custom_call.1
$region0: #{tpu_custom_call.1}
  #allocation0 [shape = 'u32[]', space=smem, size = 0x4, offset = 0x4, fixed_abs, tag = 'smem constant byte address 0x4 - core index']
  #allocation1 [shape = 'u32[144,128]{1,0:T(1,128)}', space=vmem, size = 0x12000, scoped, tag = 'internal scratch']
  %s0 = inlined_call_operand.hbm [shape: f32[2,3,2,128], index: 0, kind: input, shape index: {}]
  %s1 = inlined_call_operand.hbm [shape: f32[2,3,2,128], index: 1, kind: input, shape index: {}]
  %s2 = inlined_call_operand.vmem [shape: f32[2,1,2,128], index: 2, kind: input, shape index: {}]
  %s3 = inlined_call_operand.hbm [shape: f32[2,8,128], index: 3, kind: output, shape index: {}]
  %s4 = sld [smem:[#allocation0]]
  $region53: #{tpu_custom_call.1} parent=0
    _
  %s6 = ssub.s32 1, %s4
  %s7 = scalar_select 0, %s6, %s4
  $region1: #{tpu_custom_call.1} parent=0
    #allocation2 [shape = 'u8[6144]{0}', space=vmem, size = 0x1800, scoped, tag = 'input window, operand 0']
    #allocation3 [shape = 's32[2]{0}', space=sflag, size = 0x8, scoped, tag = 'scoped memory for tpu_custom_call.1']
    #allocation4 [shape = 's32[2]{0}', space=sflag, size = 0x8, scoped, tag = 'scoped memory for tpu_custom_call.1']
    #allocation5 [shape = 'u8[6144]{0}', space=vmem, size = 0x1800, scoped, tag = 'input window, operand 1']
    #allocation6 [shape = 's32[2]{0}', space=sflag, size = 0x8, scoped, tag = 'scoped memory for tpu_custom_call.1']
    #allocation7 [shape = 'u8[8192]{0}', space=vmem, size = 0x2000, scoped, tag = 'output window, operand 0']
    %8 = vsyncpa [#allocation3], 0
    %s9 = scalar_lea.sflag [#allocation3], 1
    %10 = vsyncpa %s9, 0
    %11 = vsyncpa [#allocation6], 0
    %s12 = scalar_lea.sflag [#allocation6], 1
    %13 = vsyncpa %s12, 0
    %14 = vsyncpa [#allocation4], 0
    %s15 = scalar_lea.sflag [#allocation4], 1
    %16 = vsyncpa %s15, 0
    loop: start=0, step=1, limit=4
    $region2: #{tpu_custom_call.1} parent=1 // loop_pre_header
      _
    $region3: #{tpu_custom_call.1} parent=1 // loop_header
      %s18 = sphi 0, %s22
      %p19 = scmp.ge.s32.totalorder %s18, 4
      %s25 = sphi 0, %s37
      %s26 = sphi 0, %s33
      %s27 = sphi 0, %s25
      %s28 = sphi 0, %s26
      %s29 = sphi 0, %s27
      %s30 = sphi 0, %s28
      %s42 = sphi 0, %s44
      %s45 = sphi 0, %s42
      %s46 = sphi 0, %s45
      %s62 = sphi 0, %s46
      %s70 = sphi 0, %s72
      %s73 = sphi 0, %s70
      %s74 = sphi 0, %s73
      %s90 = sphi 0, %s74
      %s98 = sphi 0, %s100
      %s101 = sphi 0, %s98
      %s102 = sphi 0, %s101
      %s118 = sphi 0, %s102
      %s126 = sphi 0, %s128
      %s129 = sphi 0, %s126
      %s130 = sphi 0, %s129
      %s146 = sphi 0, %s130
    $region4: #{tpu_custom_call.1} parent=1 // loop_header_branch
      %21 = sbr.rel (%p19) target = $region8
    $region5: #{tpu_custom_call.1} parent=1 // loop_body
      %s23 = ssub.s32 %s18, 1
      %s24 = ssub.s32 %s18, 2
      %s31 = sadd.s32 1, %s26
      %p32 = scmp.ge.s32.totalorder %s31, 1
      %s33 = scalar_select %p32, 0, %s31
      %s34 = sadd.s32 1, %s25
      %s35 = scalar_select %p32, %s34, %s25
      %p36 = scmp.ge.s32.totalorder %s35, 2
      %s37 = scalar_select %p36, 0, %s35
      %s38 = ssub.s32 %s25, %s37
      %s39 = ssub.s32 %s26, %s33
      %s40 = sor.u32 %s38, %s39
      %p41 = scmp.eq.s32.totalorder %s40, 0
      %s43 = sadd.s32 %s42, 1
      %s44 = scalar_select %p41, %s42, %s43
      %p47 = pneg %p41
      %p48 = scmp.eq.s32.totalorder %s18, 1
      %p49 = por %p47, %p48
      %p50 = scmp.ne.s32.totalorder %s42, %s45
      %p51 = scmp.eq.s32.totalorder %s18, 0
      %p52 = por %p50, %p51
      %p53 = scmp.ne.s32.totalorder %s42, %s45
      %p54 = scmp.eq.s32.totalorder %s23, 1
      %p55 = por %p53, %p54
      %p56 = scmp.ne.s32.totalorder %s45, %s46
      %p57 = scmp.eq.s32.totalorder %s23, 0
      %p58 = por %p56, %p57
      %p59 = scmp.ne.s32.totalorder %s45, %s46
      %p60 = scmp.eq.s32.totalorder %s24, 1
      %p61 = por %p59, %p60
      %p63 = scmp.ne.s32.totalorder %s46, %s62
      %p64 = scmp.eq.s32.totalorder %s24, 0
      %p65 = por %p63, %p64
      %s66 = ssub.s32 %s25, %s37
      %s67 = ssub.s32 %s26, %s33
      %s68 = sor.u32 %s66, %s67
      %p69 = scmp.eq.s32.totalorder %s68, 0
      %s71 = sadd.s32 %s70, 1
      %s72 = scalar_select %p69, %s70, %s71
      %p75 = pneg %p69
      %p76 = scmp.eq.s32.totalorder %s18, 1
      %p77 = por %p75, %p76
      %p78 = scmp.ne.s32.totalorder %s70, %s73
      %p79 = scmp.eq.s32.totalorder %s18, 0
      %p80 = por %p78, %p79
      %p81 = scmp.ne.s32.totalorder %s70, %s73
      %p82 = scmp.eq.s32.totalorder %s23, 1
      %p83 = por %p81, %p82
      %p84 = scmp.ne.s32.totalorder %s73, %s74
      %p85 = scmp.eq.s32.totalorder %s23, 0
      %p86 = por %p84, %p85
      %p87 = scmp.ne.s32.totalorder %s73, %s74
      %p88 = scmp.eq.s32.totalorder %s24, 1
      %p89 = por %p87, %p88
      %p91 = scmp.ne.s32.totalorder %s74, %s90
      %p92 = scmp.eq.s32.totalorder %s24, 0
      %p93 = por %p91, %p92
      %s94 = ssub.s32 %s25, %s37
      %s95 = ssub.s32 %s26, %s33
      %s96 = sor.u32 %s94, %s95
      %p97 = scmp.eq.s32.totalorder %s96, 0
      %s99 = sadd.s32 %s98, 1
      %s100 = scalar_select %p97, %s98, %s99
      %p103 = pneg %p97
      %p104 = scmp.eq.s32.totalorder %s18, 1
      %p105 = por %p103, %p104
      %p106 = scmp.ne.s32.totalorder %s98, %s101
      %p107 = scmp.eq.s32.totalorder %s18, 0
      %p108 = por %p106, %p107
      %p109 = scmp.ne.s32.totalorder %s98, %s101
      %p110 = scmp.eq.s32.totalorder %s23, 1
      %p111 = por %p109, %p110
      %p112 = scmp.ne.s32.totalorder %s101, %s102
      %p113 = scmp.eq.s32.totalorder %s23, 0
      %p114 = por %p112, %p113
      %p115 = scmp.ne.s32.totalorder %s101, %s102
      %p116 = scmp.eq.s32.totalorder %s24, 1
      %p117 = por %p115, %p116
      %p119 = scmp.ne.s32.totalorder %s102, %s118
      %p120 = scmp.eq.s32.totalorder %s24, 0
      %p121 = por %p119, %p120
      %s122 = sadd.s32 %s25, %s26
      %s123 = sadd.s32 %s37, %s33
      %s124 = ssub.s32 %s122, %s123
      %p125 = scmp.eq.s32.totalorder %s124, 0
      %s127 = sadd.s32 %s126, 1
      %s128 = scalar_select %p125, %s126, %s127
      %p131 = pneg %p125
      %p132 = scmp.eq.s32.totalorder %s18, 1
      %p133 = por %p131, %p132
      %p134 = scmp.ne.s32.totalorder %s126, %s129
      %p135 = scmp.eq.s32.totalorder %s18, 0
      %p136 = por %p134, %p135
      %p137 = scmp.ne.s32.totalorder %s126, %s129
      %p138 = scmp.eq.s32.totalorder %s23, 1
      %p139 = por %p137, %p138
      %p140 = scmp.ne.s32.totalorder %s129, %s130
      %p141 = scmp.eq.s32.totalorder %s23, 0
      %p142 = por %p140, %p141
      %p143 = scmp.ne.s32.totalorder %s129, %s130
      %p144 = scmp.eq.s32.totalorder %s24, 1
      %p145 = por %p143, %p144
      %p147 = scmp.ne.s32.totalorder %s130, %s146
      %p148 = scmp.eq.s32.totalorder %s24, 0
      %p149 = por %p147, %p148
      %p150 = scmp.le.s32.totalorder 1, %s18
      %p151 = scmp.lt.s32.totalorder %s18, 3
      %p152 = pnand %p150, %p151
      %p153 = pneg %p152
      // Predicated region
      $region9: #{tpu_custom_call.1} parent=5 // pred_check
        _
      $region10: #{tpu_custom_call.1} parent=5 // pred_check_branch
        %155 = sbr.rel (%p152) target = $region12
      $region11: #{tpu_custom_call.1} parent=5 // pred_region
        %s156 = ssub.s32 %s18, 1
      $region12: #{tpu_custom_call.1} parent=5 // pred_fallthru
        _
      %p157 = scmp.lt.s32.totalorder %s18, 2
      // Predicated region
      $region13: #{tpu_custom_call.1} parent=5 // pred_check
        %p158 = pneg %p157
      $region14: #{tpu_custom_call.1} parent=5 // pred_check_branch
        %160 = sbr.rel (%p158) target = $region16
      $region15: #{tpu_custom_call.1} parent=5 // pred_region
        // Predicated region
        $region17: #{tpu_custom_call.1} parent=15 // pred_check
          %p161 = pneg %p52
        $region18: #{tpu_custom_call.1} parent=15 // pred_check_branch
          %163 = sbr.rel (%p161) target = $region20
        $region19: #{tpu_custom_call.1} parent=15 // pred_region
          %s164 = sand.u32 %s42, 1
          %s165 = scalar_lea.sflag [#allocation3], %s164
          %s166 = sand.u32 %s42, 1
          %s167 = smul.addr %s166, 6
          %s168 = scalar_lea.vmem [#allocation2], %s167
          %s170 = ssub.s32 96, 96
          %171 = vsyncadd %s165, %s170
          %s172 = smul.addr %s25, 3
          %s173 = sadd.s32 %s26, %s172
          %s174 = smul.addr %s173, 32
          %s175 = scalar_lea.hbm %s0, %s174
          %s176 = sshll.u32 %s168, 4
          %s177 = int_to_ptr.vmem [resolvable:$true] %s176
          %182 = dma.hbm_to_vmem [thread:$0]  %s175, 96, %s177, %s165, 32, 32, 2
        $region20: #{tpu_custom_call.1} parent=15 // pred_fallthru
          _
        // Predicated region
        $region21: #{tpu_custom_call.1} parent=15 // pred_check
          %p183 = pneg %p80
        $region22: #{tpu_custom_call.1} parent=15 // pred_check_branch
          %185 = sbr.rel (%p183) target = $region24
        $region23: #{tpu_custom_call.1} parent=15 // pred_region
          %s186 = sand.u32 %s70, 1
          %s187 = scalar_lea.sflag [#allocation6], %s186
          %s188 = sand.u32 %s70, 1
          %s189 = smul.addr %s188, 6
          %s190 = scalar_lea.vmem [#allocation5], %s189
          %s192 = ssub.s32 96, 96
          %193 = vsyncadd %s187, %s192
          %s194 = smul.addr %s25, 3
          %s195 = sadd.s32 %s26, %s194
          %s196 = smul.addr %s195, 32
          %s197 = scalar_lea.hbm %s1, %s196
          %s198 = sshll.u32 %s190, 4
          %s199 = int_to_ptr.vmem [resolvable:$true] %s198
          %204 = dma.hbm_to_vmem [thread:$0]  %s197, 96, %s199, %s187, 32, 32, 2
        $region24: #{tpu_custom_call.1} parent=15 // pred_fallthru
          _
        // Predicated region
        $region25: #{tpu_custom_call.1} parent=15 // pred_check
          %p205 = pneg %p108
        $region26: #{tpu_custom_call.1} parent=15 // pred_check_branch
          %207 = sbr.rel (%p205) target = $region28
        $region27: #{tpu_custom_call.1} parent=15 // pred_region
          %p208 = scmp.lt.s32.totalorder %s25, 1
          %s209 = scalar_select %p208, %s25, 1
          %p210 = scmp.lt.s32.totalorder %s26, 0
          %s211 = scalar_select %p210, %s26, 0
          %s212 = sadd.s32 %s211, %s209
          %s213 = smul.addr %s212, 2
          %s214 = scalar_lea.vmem %s2, %s213
        $region28: #{tpu_custom_call.1} parent=15 // pred_fallthru
          _
      $region16: #{tpu_custom_call.1} parent=5 // pred_fallthru
        _
      %p215 = scmp.le.s32.totalorder 1, %s18
      %p216 = scmp.lt.s32.totalorder %s18, 3
      %p217 = pnand %p215, %p216
      %p218 = pneg %p217
      // Predicated region
      $region29: #{tpu_custom_call.1} parent=5 // pred_check
        _
      $region30: #{tpu_custom_call.1} parent=5 // pred_check_branch
        %220 = sbr.rel (%p217) target = $region32
      $region31: #{tpu_custom_call.1} parent=5 // pred_region
        %s221 = ssub.s32 %s18, 1
        %s222 = sand.u32 %s45, 1
        %s223 = scalar_lea.sflag [#allocation3], %s222
        %s224 = sand.u32 %s45, 1
        %s225 = smul.addr %s224, 6
        %s226 = scalar_lea.vmem [#allocation2], %s225
        // Predicated region
        $region33: #{tpu_custom_call.1} parent=31 // pred_check
          %p227 = pneg %p58
        $region34: #{tpu_custom_call.1} parent=31 // pred_check_branch
          %229 = sbr.rel (%p227) target = $region36
        $region35: #{tpu_custom_call.1} parent=31 // pred_region
          %230 = dma.done %s223, 96
        $region36: #{tpu_custom_call.1} parent=31 // pred_fallthru
          _
        %s231 = sand.u32 %s73, 1
        %s232 = scalar_lea.sflag [#allocation6], %s231
        %s233 = sand.u32 %s73, 1
        %s234 = smul.addr %s233, 6
        %s235 = scalar_lea.vmem [#allocation5], %s234
        // Predicated region
        $region37: #{tpu_custom_call.1} parent=31 // pred_check
          %p236 = pneg %p86
        $region38: #{tpu_custom_call.1} parent=31 // pred_check_branch
          %238 = sbr.rel (%p236) target = $region40
        $region39: #{tpu_custom_call.1} parent=31 // pred_region
          %239 = dma.done %s232, 96
        $region40: #{tpu_custom_call.1} parent=31 // pred_fallthru
          _
        %s240 = sand.u32 %s45, 1
        %s241 = scalar_lea.sflag [#allocation3], %s240
        %s242 = sand.u32 %s45, 1
        %s243 = smul.addr %s242, 6
        %s244 = scalar_lea.vmem [#allocation2], %s243
        %p245 = pneg %p58
        %p246 = pneg %p55
        %s247 = sand.u32 %s73, 1
        %s248 = scalar_lea.sflag [#allocation6], %s247
        %s249 = sand.u32 %s73, 1
        %s250 = smul.addr %s249, 6
        %s251 = scalar_lea.vmem [#allocation5], %s250
        %p252 = pneg %p86
        %p253 = pneg %p83
        %p254 = scmp.lt.s32.totalorder %s27, 1
        %s255 = scalar_select %p254, %s27, 1
        %p256 = scmp.lt.s32.totalorder %s28, 0
        %s257 = scalar_select %p256, %s28, 0
        %s258 = sadd.s32 %s257, %s255
        %s259 = smul.addr %s258, 2
        %s260 = scalar_lea.vmem %s2, %s259
        %p261 = pneg %p114
        %p262 = pneg %p111
        %p263 = pneg %p142
        %p264 = pneg %p139
        %s265 = sand.u32 %s129, 1
        %s266 = scalar_lea.sflag [#allocation4], %s265
        %s267 = sand.u32 %s129, 1
        %s268 = smul.addr %s267, 8
        %s269 = scalar_lea.vmem [#allocation7], %s268
        %p270 = scmp.lt.s32.totalorder %s27, 1
        %s271 = scalar_select %p270, %s27, 1
        %p272 = scmp.lt.s32.totalorder %s28, 0
        %s273 = scalar_select %p272, %s28, 0
        %s274 = sadd.s32 %s273, %s271
        %s275 = smul.addr %s274, 2
        %s276 = scalar_lea.vmem %s2, %s275
        %s277 = sadd.s32 %s27, %s28
        %v278 = vld [vmem:[%s226] sm:$0x3]
        %v279 = vld [vmem:[%s226 + $0x2] sm:$0x3]
        %v280 = vld [vmem:[%s226 + $0x4] sm:$0x3]
        %v281 = vld [vmem:[%s235] sm:$0x3]
        %v282 = vld [vmem:[%s235 + $0x2] sm:$0x3]
        %v283 = vld [vmem:[%s235 + $0x4] sm:$0x3]
        %v284 = vmul.f32 %v278, %v281
        %v285 = vmul.f32 %v279, %v282
        %v286 = vmul.f32 %v280, %v283
        %vm287 = vcmask 1041408
        %v288 = vsel %vm287, %v284, 0.0
        %v289 = vsel %vm287, %v285, 0.0
        %v290 = vadd.f32 %v288, %v289
        %v291 = vsel %vm287, %v286, 0.0
        %v292 = vadd.f32 %v290, %v291
        %v293 = vmul.f32 %v278, %v278
        %v294 = vmul.f32 %v279, %v279
        %v295 = vmul.f32 %v280, %v280
        %v296 = vsel %vm287, %v293, 0.0
        %v297 = vsel %vm287, %v294, 0.0
        %v298 = vadd.f32 %v296, %v297
        %v299 = vsel %vm287, %v295, 0.0
        %v300 = vadd.f32 %v298, %v299
        %v301 = vmul.f32 %v281, %v281
        %v302 = vmul.f32 %v282, %v282
        %v303 = vmul.f32 %v283, %v283
        %v304 = vsel %vm287, %v301, 0.0
        %v305 = vsel %vm287, %v302, 0.0
        %v306 = vadd.f32 %v304, %v305
        %v307 = vsel %vm287, %v303, 0.0
        %v308 = vadd.f32 %v306, %v307
        %v309 = vrsqrt.pop %v300
        %v310 = vmul.f32 %v300, %v309
        %vm311 = vcmp.eq.f32.partialorder %v300, inf
        %v312 = vsel %vm311, %v300, %v310
        %vm313 = vcmp.eq.f32.partialorder %v300, 0.0
        %v314 = vand.u32 %v300, 2147483648
        %v315 = vsel %vm313, %v314, %v312
        %v316 = vrsqrt.pop %v308
        %v317 = vmul.f32 %v308, %v316
        %vm318 = vcmp.eq.f32.partialorder %v308, inf
        %v319 = vsel %vm318, %v308, %v317
        %vm320 = vcmp.eq.f32.partialorder %v308, 0.0
        %v321 = vand.u32 %v308, 2147483648
        %v322 = vsel %vm320, %v321, %v319
        %v323 = vmul.f32 %v315, %v322
        %v324 = vmax.f32 %v323, 1e-06
        %v325 = vrcp.pop %v324
        %v326 = vmul.f32 %v324, %v325
        %v327 = vsub.f32 2.0, %v326
        %v328 = vmul.f32 %v325, %v327
        %v329 = vmul.f32 %v292, %v328
        %v330 = vsub.f32 1.0, %v329
        %v331 = vsub.f32 %v315, %v322
        %v332 = vmul.f32 %v331, %v331
        %v333 = vld [vmem:[%s276] sm:$0x3]
        %v334 = vmul.f32 %v333, %v330
        %v335 = vmul.f32 %v333, %v332
        %vm336 = vcmp.gt.f32.partialorder %v333, 0.0
        %v337 = vsel %vm336, 1, 0
        %v338 = vcvt.s32.f32 %v337
        %v339 = vsel %vm287, %v334, 0.0
        %340 = vadd.xlane.f32.xlu0 %v339
        %v341 = vpop.xlane.xlu0 %340
        %v342 = vrot.slane %v341, 4
        %v343 = vadd.f32 %v341, %v342
        %v344 = vrot.slane %v343, 2
        %v345 = vadd.f32 %v343, %v344
        %v346 = vrot.slane %v345, 1
        %v347 = vadd.f32 %v345, %v346
        %s348 = vtos %v347
        %v349 = vsel %vm287, %v335, 0.0
        %350 = vadd.xlane.f32.xlu0 %v349
        %v351 = vpop.xlane.xlu0 %350
        %v352 = vrot.slane %v351, 4
        %v353 = vadd.f32 %v351, %v352
        %v354 = vrot.slane %v353, 2
        %v355 = vadd.f32 %v353, %v354
        %v356 = vrot.slane %v355, 1
        %v357 = vadd.f32 %v355, %v356
        %s358 = vtos %v357
        %v359 = vsel %vm287, %v338, 0.0
        %360 = vadd.xlane.f32.xlu0 %v359
        %v361 = vpop.xlane.xlu0 %360
        %v362 = vrot.slane %v361, 4
        %v363 = vadd.f32 %v361, %v362
        %v364 = vrot.slane %v363, 2
        %v365 = vadd.f32 %v363, %v364
        %v366 = vrot.slane %v365, 1
        %v367 = vadd.f32 %v365, %v366
        %s368 = vtos %v367
        %v369 = vlaneseq
        %v370 = vshrl.u32 %v369, 7
        %vm371 = vcmp.eq.s32.totalorder %v370, 0
        %vm372 = vcmp.eq.s32.totalorder %v370, 1
        %vm373 = vcmp.eq.s32.totalorder %v370, 2
        %v374 = vstv %s368
        %v375 = vsel %vm373, %v374, 0.0
        %v376 = vstv %s358
        %v377 = vsel %vm372, %v376, %v375
        %v378 = vstv %s348
        %v379 = vsel %vm371, %v378, %v377
        %380 = vst [vmem:[%s269] sm:$0xff] %v379
        %s381 = sand.u32 %s129, 1
        %s382 = scalar_lea.sflag [#allocation4], %s381
        %s383 = sand.u32 %s129, 1
        %s384 = smul.addr %s383, 8
        %s385 = scalar_lea.vmem [#allocation7], %s384
        // Predicated region
        $region41: #{tpu_custom_call.1} parent=31 // pred_check
          %p386 = pneg %p139
        $region42: #{tpu_custom_call.1} parent=31 // pred_check_branch
          %388 = sbr.rel (%p386) target = $region44
        $region43: #{tpu_custom_call.1} parent=31 // pred_region
          %s389 = sadd.s32 %s27, %s28
          %s391 = ssub.s32 128, 128
          %392 = vsyncadd %s382, %s391
          %s393 = smul.addr %s389, 128
          %s394 = scalar_lea.hbm %s3, %s393
          %s396 = sshll.u32 %s385, 4
          %s397 = int_to_ptr.vmem [resolvable:$true] %s396
          %399 = dma.vmem_to_hbm [thread:$0]  %s397, 128, %s394, %s382
        $region44: #{tpu_custom_call.1} parent=31 // pred_fallthru
          _
      $region32: #{tpu_custom_call.1} parent=5 // pred_fallthru
        _
      %p400 = scmp.le.s32.totalorder 2, %s18
      // Predicated region
      $region45: #{tpu_custom_call.1} parent=5 // pred_check
        %p401 = pneg %p400
      $region46: #{tpu_custom_call.1} parent=5 // pred_check_branch
        %403 = sbr.rel (%p401) target = $region48
      $region47: #{tpu_custom_call.1} parent=5 // pred_region
        %s404 = ssub.s32 %s18, 2
        // Predicated region
        $region49: #{tpu_custom_call.1} parent=47 // pred_check
          %p405 = pneg %p145
        $region50: #{tpu_custom_call.1} parent=47 // pred_check_branch
          %407 = sbr.rel (%p405) target = $region52
        $region51: #{tpu_custom_call.1} parent=47 // pred_region
          %s408 = sand.u32 %s130, 1
          %s409 = scalar_lea.sflag [#allocation4], %s408
          %s410 = sand.u32 %s130, 1
          %s411 = smul.addr %s410, 8
          %s412 = scalar_lea.vmem [#allocation7], %s411
          %413 = dma.done %s409, 128
        $region52: #{tpu_custom_call.1} parent=47 // pred_fallthru
          _
      $region48: #{tpu_custom_call.1} parent=5 // pred_fallthru
        _
    $region6: #{tpu_custom_call.1} parent=1 // loop_footer
      %s22 = sadd.s32 1, %s18
    $region7: #{tpu_custom_call.1} parent=1 // loop_footer_branch
      %17 = sbr.rel target = $region3
    $region8: #{tpu_custom_call.1} parent=1 // loop_exit
      _
    %414 = vsyncpa [#allocation3], 1
    %s415 = scalar_lea.sflag [#allocation3], 1
    %416 = vsyncpa %s415, 1
    %417 = vsyncpa [#allocation6], 1
    %s418 = scalar_lea.sflag [#allocation6], 1
    %419 = vsyncpa %s418, 1
    %420 = vsyncpa [#allocation4], 1
    %s421 = scalar_lea.sflag [#allocation4], 1
    %422 = vsyncpa %s421, 1

</llo_original>
